<compile_context>
chip_gen: v5e
topology: v5e:2x2
jax: 0.10.0
libtpu: 0.0.40
codegen_flags: <defaults>
</compile_context>

<pallas_src>
import jax
import jax.numpy as jnp
from jax import lax
from jax.experimental import pallas as pl
from jax.experimental.pallas import tpu as pltpu


def _predict_kernel(xt_ref, pred_val_ref, pred_ref):
    """Inputs are transposed logits (C, TB); reduce over axis 0 (classes).

    pred_val = max(softmax(x)) = 1 / sum(exp(x - max(x)))
    pred     = first-occurrence argmax over classes (on raw logits).
    """
    x = xt_ref[...].astype(jnp.float32)                      # (C, TB)
    C = x.shape[0]

    m = jnp.max(x, axis=0, keepdims=True)                    # (1, TB)
    e = jnp.exp(x - m)                                       # EUP
    s = jnp.sum(e, axis=0, keepdims=True)                    # (1, TB)

    # max softmax probability == 1 / sum(exp(x - m))
    pred_val_ref[...] = pl.reciprocal(s, approx=False).astype(pred_val_ref.dtype)

    # argmax on the raw logits (softmax is monotone) -> first occurrence.
    cls = lax.broadcasted_iota(jnp.int32, x.shape, 0)         # class index per row
    idx = jnp.where(x == m, cls, jnp.int32(C))                # non-max -> sentinel
    pred_ref[...] = jnp.min(idx, axis=0, keepdims=True).astype(pred_ref.dtype)


def predict(logits, max_tile_b=1024):
    """Pallas equivalent of BaseModel.predict(x) given logits = forward(x).

    Returns (pred_val, pred); `pred` are int32 class indices (PyTorch's
    torch.max would return int64; JAX defaults to 32-bit).
    """
    B, C = logits.shape

    # Lane-dense layout: batch on the lane axis, padded to a multiple of 128.
    LANE = 128
    Bp = max(pl.cdiv(B, LANE) * LANE, LANE)
    TB = min(max_tile_b, Bp)                 # tile of batch columns (mult of 128)
    Bp = pl.cdiv(Bp, TB) * TB                # make grid exact
    grid_b = Bp // TB

    # Wrapper-side layout plumbing: pad batch, transpose to (C, Bp).
    xt = jnp.pad(logits, ((0, Bp - B), (0, 0))).T             # (C, Bp)

    pred_val, pred = pl.pallas_call(
        _predict_kernel,
        out_shape=(
            jax.ShapeDtypeStruct((1, Bp), jnp.float32),
            jax.ShapeDtypeStruct((1, Bp), jnp.int32),
        ),
        grid=(grid_b,),
        in_specs=[pl.BlockSpec((C, TB), lambda i: (0, i))],
        out_specs=(
            pl.BlockSpec((1, TB), lambda i: (0, i)),
            pl.BlockSpec((1, TB), lambda i: (0, i)),
        ),
        compiler_params=pltpu.CompilerParams(
            dimension_semantics=("parallel",),
        ),
        cost_estimate=pl.CostEstimate(
            flops=5 * Bp * C,
            transcendentals=Bp * C,
            bytes_accessed=Bp * C * 4 + Bp * 8,
        ),
    )(xt)

    return pred_val[0, :B], pred[0, :B]


def predict_ref(logits):
    """Pure-JAX reference for correctness checking (mirrors torch predict())."""
    y = jax.nn.softmax(logits.astype(jnp.float32), axis=1)
    return jnp.max(y, axis=1), jnp.argmax(y, axis=1).astype(jnp.int32)


if __name__ == "__main__":
    # MNIST-style classifier logits: DEFAULT_MINI_BATCH_SIZE=32, 10 classes.
    B, C = 32, 10
    key = jax.random.PRNGKey(0)
    logits = jax.random.normal(key, (B, C), dtype=jnp.float32)

    pred_val, pred = predict(logits)
    jax.block_until_ready((pred_val, pred))

    ref_val, ref_pred = predict_ref(logits)
    assert pred_val.shape == (B,) and pred.shape == (B,)
    assert jnp.allclose(pred_val, ref_val, atol=1e-6, rtol=1e-6), "softmax max mismatch"
    assert jnp.array_equal(pred, ref_pred), "argmax mismatch"

    print("KERNEL_OK")
</pallas_src>

<mosaic_0001>
module attributes {stable_mosaic.version = 11 : i64} {
  func.func @_predict_kernel(%arg0: i32, %arg1: memref<10x128xf32, #tpu.memory_space<vmem>>, %arg2: memref<1x128xf32, #tpu.memory_space<vmem>>, %arg3: memref<1x128xi32, #tpu.memory_space<vmem>>) attributes {dimension_semantics = [#tpu.dimension_semantics<parallel>], iteration_bounds = array<i64: 1>, scalar_prefetch = 0 : i64, scratch_operands = 0 : i64, tpu.core_type = #tpu.core_type<tc>, window_params = [{transform_indices = @transform_0, window_bounds = array<i64: 10, 128>}, {transform_indices = @transform_1, window_bounds = array<i64: 1, 128>}, {transform_indices = @transform_2, window_bounds = array<i64: 1, 128>}]} {
    %c0 = arith.constant 0 : index
    %c0_0 = arith.constant 0 : index
    %0 = vector.load %arg1[%c0, %c0_0] : memref<10x128xf32, #tpu.memory_space<vmem>>, vector<10x128xf32>
    %cst = arith.constant dense<0xFF800000> : vector<128xf32>
    %1 = vector.multi_reduction <maximumf>, %0, %cst [0] : vector<10x128xf32> to vector<128xf32>
    %2 = vector.shape_cast %1 : vector<128xf32> to vector<1x128xf32>
    %3 = vector.broadcast %2 : vector<1x128xf32> to vector<10x128xf32>
    %4 = arith.subf %0, %3 : vector<10x128xf32>
    %5 = math.exp %4 : vector<10x128xf32>
    %cst_1 = arith.constant dense<0.000000e+00> : vector<128xf32>
    %6 = vector.multi_reduction <add>, %5, %cst_1 [0] : vector<10x128xf32> to vector<128xf32>
    %7 = vector.shape_cast %6 : vector<128xf32> to vector<1x128xf32>
    %8 = tpu.reciprocal %7 : vector<1x128xf32> -> vector<1x128xf32>
    %c0_2 = arith.constant 0 : index
    %c0_3 = arith.constant 0 : index
    %9 = vector.load %arg2[%c0_2, %c0_3] : memref<1x128xf32, #tpu.memory_space<vmem>>, vector<1x128xf32>
    tpu.vector_store %arg2[%c0_2, %c0_3], %8 {strides = array<i32>} : memref<1x128xf32, #tpu.memory_space<vmem>>, vector<1x128xf32>,
    %10 = tpu.iota {dimensions = array<i32: 0>} : vector<10x128xi32>
    %11 = vector.broadcast %2 : vector<1x128xf32> to vector<10x128xf32>
    %12 = arith.cmpf oeq, %0, %11 : vector<10x128xf32>
    %c10_i32 = arith.constant 10 : i32
    %13 = vector.broadcast %c10_i32 : i32 to vector<10x128xi32>
    %14 = arith.select %12, %10, %13 : vector<10x128xi1>, vector<10x128xi32>
    %cst_4 = arith.constant dense<2147483647> : vector<128xi32>
    %15 = vector.multi_reduction <minsi>, %14, %cst_4 [0] : vector<10x128xi32> to vector<128xi32>
    %16 = vector.shape_cast %15 : vector<128xi32> to vector<1x128xi32>
    %c0_5 = arith.constant 0 : index
    %c0_6 = arith.constant 0 : index
    %17 = vector.load %arg3[%c0_5, %c0_6] : memref<1x128xi32, #tpu.memory_space<vmem>>, vector<1x128xi32>
    tpu.vector_store %arg3[%c0_5, %c0_6], %16 {strides = array<i32>} : memref<1x128xi32, #tpu.memory_space<vmem>>, vector<1x128xi32>,
    return
  }
  func.func @transform_0(%arg0: i32) -> (i32, i32) {
    %c0_i32 = arith.constant 0 : i32
    %c0_i32_0 = arith.constant 0 : i32
    return %c0_i32, %arg0 : i32, i32
  }
  func.func @transform_1(%arg0: i32) -> (i32, i32) {
    %c0_i32 = arith.constant 0 : i32
    %c0_i32_0 = arith.constant 0 : i32
    return %c0_i32, %arg0 : i32, i32
  }
  func.func @transform_2(%arg0: i32) -> (i32, i32) {
    %c0_i32 = arith.constant 0 : i32
    %c0_i32_0 = arith.constant 0 : i32
    return %c0_i32, %arg0 : i32, i32
  }
}

</mosaic_0001>

<llo_original>
// kernel: tpu_custom_call.1
$region0: #{tpu_custom_call.1}
  #allocation0 [shape = 'u32[]', space=smem, size = 0x4, offset = 0x4, fixed_abs, tag = 'smem constant byte address 0x4 - core index']
  #allocation1 [shape = 'u32[72,128]{1,0:T(1,128)}', space=vmem, size = 0x9000, scoped, tag = 'internal scratch']
  %s0 = inlined_call_operand.hbm [shape: f32[10,128], index: 0, kind: input, shape index: {}]
  %s1 = inlined_call_operand.hbm [shape: f32[1,128], index: 1, kind: output, shape index: {0}]
  %s2 = inlined_call_operand.hbm [shape: s32[1,128], index: 2, kind: output, shape index: {1}]
  %3 = xla_tuple %s1, %s2
  %s4 = sld [smem:[#allocation0]]
  $region26: #{tpu_custom_call.1} parent=0
    _
  %s6 = ssub.s32 1, %s4
  %s7 = scalar_select 0, %s6, %s4
  $region1: #{tpu_custom_call.1} parent=0
    #allocation2 [shape = 'u8[8192]{0}', space=vmem, size = 0x2000, scoped, tag = 'input window, operand 0, single buffered']
    #allocation3 [shape = 's32[1]{0}', space=sflag, size = 0x4, scoped, tag = 'scoped memory for tpu_custom_call.1']
    #allocation4 [shape = 's32[1]{0}', space=sflag, size = 0x4, scoped, tag = 'scoped memory for tpu_custom_call.1']
    #allocation5 [shape = 'u8[512]{0}', space=vmem, size = 0x400, scoped, tag = 'output window, operand 0, single buffered']
    #allocation6 [shape = 'u8[512]{0}', space=vmem, size = 0x400, scoped, tag = 'output window, operand 1, single buffered']
    #allocation7 [shape = 's32[1]{0}', space=sflag, size = 0x4, scoped, tag = 'scoped memory for tpu_custom_call.1']
    %8 = vsyncpa [#allocation3], 0
    %9 = vsyncpa [#allocation4], 0
    %10 = vsyncpa [#allocation7], 0
    // Predicated region
    $region2: #{tpu_custom_call.1} parent=1 // pred_check
      _
    $region3: #{tpu_custom_call.1} parent=1 // pred_check_branch
      %12 = sbr.rel (0) target = $region5
    $region4: #{tpu_custom_call.1} parent=1 // pred_region
      %14 = vsyncadd [#allocation3], 0
      %s15 = sshll.u32 %s0, 4
      %s16 = int_to_ptr.hbm [resolvable:$true] %s15
      %s17 = sshll.u32 [#allocation2], 4
      %s18 = int_to_ptr.vmem [resolvable:$true] %s17
      %23 = dma.hbm_to_vmem [thread:$0]  %s16, 256, %s18, [#allocation3], 128, 128, 8
    $region5: #{tpu_custom_call.1} parent=1 // pred_fallthru
      _
    // Predicated region
    $region6: #{tpu_custom_call.1} parent=1 // pred_check
      _
    $region7: #{tpu_custom_call.1} parent=1 // pred_check_branch
      %25 = sbr.rel (0) target = $region9
    $region8: #{tpu_custom_call.1} parent=1 // pred_region
      %27 = dma.done [#allocation3], 256
    $region9: #{tpu_custom_call.1} parent=1 // pred_fallthru
      _
    %v28 = vld [vmem:[#allocation2] sm:$0xff]
    %v29 = vld [vmem:[#allocation2 + $0x8] sm:$0x3]
    %vm30 = vcmask 1041408
    %v31 = vsel %vm30, %v29, -inf
    %v32 = vmax.f32 %v28, %v31
    %v33 = vrot.slane %v32, 4
    %v34 = vmax.f32 %v32, %v33
    %v35 = vrot.slane %v34, 2
    %v36 = vmax.f32 %v34, %v35
    %v37 = vrot.slane %v36, 1
    %v38 = vmax.f32 %v36, %v37
    %v39 = vsub.f32 %v28, %v38
    %v40 = vsub.f32 %v29, %v38
    %v41 = vmul.f32 %v39, 1.442695
    %v42 = vpow.pop %v41
    %v43 = vmul.f32 %v40, 1.442695
    %v44 = vpow.pop %v43
    %v45 = vsel %vm30, %v44, 0.0
    %v46 = vadd.f32 %v42, %v45
    %v47 = vrot.slane %v46, 4
    %v48 = vadd.f32 %v46, %v47
    %v49 = vrot.slane %v48, 2
    %v50 = vadd.f32 %v48, %v49
    %v51 = vrot.slane %v50, 1
    %v52 = vadd.f32 %v50, %v51
    %v53 = vrcp.pop %v52
    %v54 = vmul.f32 %v52, %v53
    %v55 = vsub.f32 1.0, %v54
    %v56 = vmul.f32 %v53, %v55
    %v57 = vadd.f32 %v53, %v56
    %vm58 = vweird.f32 %v52
    %vm59 = vweird.f32 %v53
    %vm60 = vmor %vm58, %vm59
    %v61 = vsel %vm60, %v53, %v57
    %v62 = vand.u32 2147483647, %v52
    %vm63 = vcmp.eq.f32.partialorder %v62, 8.507059e+37
    %v64 = vand.u32 %v52, 2147483648
    %v65 = vor.u32 1.1754944e-38, %v64
    %v66 = vsel %vm63, %v65, %v61
    %67 = vst [vmem:[#allocation5] sm:$0x1] %v66
    %v68 = vlaneseq
    %v69 = vshrl.u32 %v68, 7
    %v70 = vadd.s32 %v69, 8
    %vm71 = vcmp.eq.f32.partialorder %v28, %v38
    %vm72 = vcmp.eq.f32.partialorder %v29, %v38
    %v73 = vsel %vm71, %v69, 10
    %v74 = vsel %vm72, %v70, 10
    %v75 = vsel %vm30, %v74, 2147483647
    %vm76 = vcmp.lt.s32.totalorder %v73, %v75
    %v77 = vsel %vm76, %v73, %v75
    %v78 = vrot.slane %v77, 4
    %vm79 = vcmp.lt.s32.totalorder %v77, %v78
    %v80 = vsel %vm79, %v77, %v78
    %v81 = vrot.slane %v80, 2
    %vm82 = vcmp.lt.s32.totalorder %v80, %v81
    %v83 = vsel %vm82, %v80, %v81
    %v84 = vrot.slane %v83, 1
    %vm85 = vcmp.lt.s32.totalorder %v83, %v84
    %v86 = vsel %vm85, %v83, %v84
    %87 = vst [vmem:[#allocation6] sm:$0x1] %v86
    // Predicated region
    $region10: #{tpu_custom_call.1} parent=1 // pred_check
      _
    $region11: #{tpu_custom_call.1} parent=1 // pred_check_branch
      %89 = sbr.rel (0) target = $region13
    $region12: #{tpu_custom_call.1} parent=1 // pred_region
      %91 = vsyncadd [#allocation4], 0
      %s93 = sshll.u32 [#allocation5], 4
      %s94 = int_to_ptr.vmem [resolvable:$true] %s93
      %s95 = sshll.u32 %s1, 4
      %s96 = int_to_ptr.hbm [resolvable:$true] %s95
      %98 = dma.vmem_to_hbm [thread:$0]  %s94, 16, %s96, [#allocation4]
    $region13: #{tpu_custom_call.1} parent=1 // pred_fallthru
      _
    // Predicated region
    $region14: #{tpu_custom_call.1} parent=1 // pred_check
      _
    $region15: #{tpu_custom_call.1} parent=1 // pred_check_branch
      %100 = sbr.rel (0) target = $region17
    $region16: #{tpu_custom_call.1} parent=1 // pred_region
      %102 = vsyncadd [#allocation7], 0
      %s104 = sshll.u32 [#allocation6], 4
      %s105 = int_to_ptr.vmem [resolvable:$true] %s104
      %s106 = sshll.u32 %s2, 4
      %s107 = int_to_ptr.hbm [resolvable:$true] %s106
      %109 = dma.vmem_to_hbm [thread:$0]  %s105, 16, %s107, [#allocation7]
    $region17: #{tpu_custom_call.1} parent=1 // pred_fallthru
      _
    // Predicated region
    $region18: #{tpu_custom_call.1} parent=1 // pred_check
      _
    $region19: #{tpu_custom_call.1} parent=1 // pred_check_branch
      %111 = sbr.rel (0) target = $region21
    $region20: #{tpu_custom_call.1} parent=1 // pred_region
      %113 = dma.done [#allocation4], 16
    $region21: #{tpu_custom_call.1} parent=1 // pred_fallthru
      _
    // Predicated region
    $region22: #{tpu_custom_call.1} parent=1 // pred_check
      _
    $region23: #{tpu_custom_call.1} parent=1 // pred_check_branch
      %115 = sbr.rel (0) target = $region25
    $region24: #{tpu_custom_call.1} parent=1 // pred_region
      %117 = dma.done [#allocation7], 16
    $region25: #{tpu_custom_call.1} parent=1 // pred_fallthru
      _
    %118 = vsyncpa [#allocation3], 1
    %119 = vsyncpa [#allocation4], 1
    %120 = vsyncpa [#allocation7], 1

</llo_original>
